<compile_context>
chip_gen: v6e
topology: v6e:2x2x1
jax: 0.10.0
libtpu: 0.0.40
codegen_flags: <defaults>
</compile_context>

<pallas_src>
import math

import jax
import jax.numpy as jnp
from jax import lax
from jax.experimental import pallas as pl
from jax.experimental.pallas import tpu as pltpu

_LANES = 128
_MAX_TILE_ROWS = 4096                  # 4096 x 128 f32 = 2 MiB per input block
_VMEM_LIMIT_BYTES = 32 * 1024 * 1024   # > v5e's 16 MiB default, <= v7x's cap


def _make_partial_kernel(tile_rows, valid_rows, needs_mask, has_weights):
    """Kernel: write sum over rows of w * (o - t)^2 for this tile to out[0,0,:]."""

    def kernel(*refs):
        if has_weights:
            o_ref, t_ref, w_ref, out_ref = refs
        else:
            o_ref, t_ref, out_ref = refs

        # Read in native dtype, promote in-register (halves HBM traffic for
        # bf16/f16 inputs; VPU promotion is cheap).
        o = o_ref[...].astype(jnp.float32)
        t = t_ref[...].astype(jnp.float32)
        d = o - t
        val = d * d
        if has_weights:
            val = w_ref[...].astype(jnp.float32) * val

        if needs_mask:
            # Only the final grid step can contain out-of-bounds rows; gate
            # the iota+cmp+select mask to that step only.
            i = pl.program_id(0)
            last = pl.num_programs(0) - 1

            @pl.when(i != last)
            def _():
                out_ref[0, 0, :] = jnp.sum(val, axis=0)

            @pl.when(i == last)
            def _():
                row = lax.broadcasted_iota(jnp.int32, (tile_rows, _LANES), 0)
                valid = (i * tile_rows + row) < valid_rows
                # Use where (select), not multiply: OOB rows may hold NaN/Inf.
                out_ref[0, 0, :] = jnp.sum(jnp.where(valid, val, 0.0), axis=0)
        else:
            out_ref[0, 0, :] = jnp.sum(val, axis=0)

    return kernel


def mse_with_pos(outputs, targets, pos_weights, *, max_tile_rows=_MAX_TILE_ROWS):
    """Pallas implementation of MseWithPos.forward."""
    shape = jnp.broadcast_shapes(outputs.shape, targets.shape, pos_weights.shape)
    count = math.prod(shape) if shape else 1

    out_dtype = jnp.result_type(outputs.dtype, targets.dtype, pos_weights.dtype)
    if not jnp.issubdtype(out_dtype, jnp.floating):
        out_dtype = jnp.float32

    if count == 0:
        # torch's .mean() over an empty tensor is NaN.
        return jnp.array(jnp.nan, dtype=out_dtype)

    # Scalar (size-1) weights: factor out of the sum -> only two HBM streams.
    scalar_weight = None
    w = pos_weights
    if pos_weights.size == 1:
        scalar_weight = pos_weights.reshape(()).astype(jnp.float32)
        w = None

    def prep(x):
        if x.shape != shape:
            # TODO(synk): low-rank (e.g. per-channel) tensors could be kept
            # whole in VMEM and broadcast inside the kernel instead of being
            # materialized into a full-size HBM stream here.
            x = jnp.broadcast_to(x, shape)
        return x.reshape(-1)

    o = prep(outputs)
    t = prep(targets)
    w = prep(w) if w is not None else None

    # Split into a 128-aligned prefix (Pallas kernel) and a <128-element tail
    # (plain jnp) -- no full-array jnp.pad pass over the inputs.
    rem = count % _LANES
    main = count - rem

    total = jnp.float32(0.0)
    if rem:
        d_tail = o[main:].astype(jnp.float32) - t[main:].astype(jnp.float32)
        tail = d_tail * d_tail
        if w is not None:
            tail = w[main:].astype(jnp.float32) * tail
        total = total + jnp.sum(tail)

    if main:
        rows = main // _LANES
        tile_rows = min(max_tile_rows, rows)
        n_tiles = (rows + tile_rows - 1) // tile_rows
        needs_mask = (rows % tile_rows) != 0

        o_main = o if not rem else o[:main]
        t_main = t if not rem else t[:main]
        ins = [o_main.reshape(rows, _LANES), t_main.reshape(rows, _LANES)]
        if w is not None:
            w_main = w if not rem else w[:main]
            ins.append(w_main.reshape(rows, _LANES))

        kernel = _make_partial_kernel(tile_rows, rows, needs_mask, w is not None)
        tile_spec = pl.BlockSpec((tile_rows, _LANES), lambda i: (i, 0))

        partials = pl.pallas_call(
            kernel,
            out_shape=jax.ShapeDtypeStruct((n_tiles, 1, _LANES), jnp.float32),
            grid_spec=pltpu.PrefetchScalarGridSpec(
                num_scalar_prefetch=0,
                grid=(n_tiles,),
                in_specs=[tile_spec] * len(ins),
                # Lane-dense per-tile partials in VMEM (unmasked vst, no
                # per-step scalar SMEM writeback); finish the 128-lane
                # reduction in the wrapper.
                out_specs=pl.BlockSpec((1, 1, _LANES), lambda i: (i, 0, 0)),
            ),
            compiler_params=pltpu.CompilerParams(
                dimension_semantics=("parallel",),
                vmem_limit_bytes=_VMEM_LIMIT_BYTES,
            ),
        )(*ins)
        total = total + jnp.sum(partials)

    if scalar_weight is not None:
        total = total * scalar_weight

    return (total / jnp.float32(count)).astype(out_dtype)


if __name__ == "__main__":
    key = jax.random.PRNGKey(0)
    k1, k2, k3 = jax.random.split(key, 3)

    # Test 1: full-shape pos_weights, NCHW (B=2, C=4, H=16, W=16); numel % 128 == 0.
    shape = (2, 4, 16, 16)
    outputs = jax.random.normal(k1, shape, dtype=jnp.float32)
    targets = jax.random.normal(k2, shape, dtype=jnp.float32)
    pos_weights = jax.random.uniform(k3, shape, dtype=jnp.float32) + 0.5

    loss = jax.block_until_ready(mse_with_pos(outputs, targets, pos_weights))
    ref = jnp.mean(pos_weights * (outputs - targets) ** 2)
    assert jnp.allclose(loss, ref, rtol=1e-5, atol=1e-6), (loss, ref)

    # Test 2: scalar pos_weight -> factored out, 2-input kernel (no w stream).
    w_scalar = jnp.float32(0.7)
    loss2 = jax.block_until_ready(mse_with_pos(outputs, targets, w_scalar))
    ref2 = jnp.mean(w_scalar * (outputs - targets) ** 2)
    assert jnp.allclose(loss2, ref2, rtol=1e-5, atol=1e-6), (loss2, ref2)

    # Test 3: ragged numel (prefix kernel + jnp tail) with a forced partial
    # last tile (in-kernel row mask), using a tiny tile cap to exercise it.
    shape3 = (3, 5, 7, 11)  # 1155 elements -> 9 full rows + 3-element tail
    o3 = jax.random.normal(k1, shape3, dtype=jnp.float32)
    t3 = jax.random.normal(k2, shape3, dtype=jnp.float32)
    w3 = jax.random.uniform(k3, shape3, dtype=jnp.float32) + 0.5
    loss3 = jax.block_until_ready(mse_with_pos(o3, t3, w3, max_tile_rows=8))
    ref3 = jnp.mean(w3 * (o3 - t3) ** 2)
    assert jnp.allclose(loss3, ref3, rtol=1e-5, atol=1e-6), (loss3, ref3)

    print("KERNEL_OK")
</pallas_src>

<mosaic_0001>
module attributes {stable_mosaic.version = 11 : i64} {
  func.func @kernel(%arg0: i32, %arg1: memref<16x128xf32, #tpu.memory_space<vmem>>, %arg2: memref<16x128xf32, #tpu.memory_space<vmem>>, %arg3: memref<16x128xf32, #tpu.memory_space<vmem>>, %arg4: memref<1x1x128xf32, #tpu.memory_space<vmem>>) attributes {dimension_semantics = [#tpu.dimension_semantics<parallel>], iteration_bounds = array<i64: 1>, scalar_prefetch = 0 : i64, scratch_operands = 0 : i64, tpu.core_type = #tpu.core_type<tc>, window_params = [{transform_indices = @transform_0, window_bounds = array<i64: 16, 128>}, {transform_indices = @transform_1, window_bounds = array<i64: 16, 128>}, {transform_indices = @transform_2, window_bounds = array<i64: 16, 128>}, {transform_indices = @transform_3, window_bounds = array<i64: 1, 1, 128>}]} {
    %c0 = arith.constant 0 : index
    %c0_0 = arith.constant 0 : index
    %0 = vector.load %arg1[%c0, %c0_0] : memref<16x128xf32, #tpu.memory_space<vmem>>, vector<16x128xf32>
    %c0_1 = arith.constant 0 : index
    %c0_2 = arith.constant 0 : index
    %1 = vector.load %arg2[%c0_1, %c0_2] : memref<16x128xf32, #tpu.memory_space<vmem>>, vector<16x128xf32>
    %2 = arith.subf %0, %1 : vector<16x128xf32>
    %3 = arith.mulf %2, %2 : vector<16x128xf32>
    %c0_3 = arith.constant 0 : index
    %c0_4 = arith.constant 0 : index
    %4 = vector.load %arg3[%c0_3, %c0_4] : memref<16x128xf32, #tpu.memory_space<vmem>>, vector<16x128xf32>
    %5 = arith.mulf %4, %3 : vector<16x128xf32>
    %cst = arith.constant dense<0.000000e+00> : vector<128xf32>
    %6 = vector.multi_reduction <add>, %5, %cst [0] : vector<16x128xf32> to vector<128xf32>
    %c0_5 = arith.constant 0 : index
    %c0_6 = arith.constant 0 : index
    %c0_7 = arith.constant 0 : index
    %7 = vector.load %arg4[%c0_5, %c0_6, %c0_7] : memref<1x1x128xf32, #tpu.memory_space<vmem>>, vector<1x1x128xf32>
    %8 = vector.shape_cast %7 : vector<1x1x128xf32> to vector<128xf32>
    %9 = vector.shape_cast %6 : vector<128xf32> to vector<1x1x128xf32>
    tpu.vector_store %arg4[%c0_5, %c0_6, %c0_7], %9 {strides = array<i32>} : memref<1x1x128xf32, #tpu.memory_space<vmem>>, vector<1x1x128xf32>,
    return
  }
  func.func @transform_0(%arg0: i32) -> (i32, i32) {
    %c0_i32 = arith.constant 0 : i32
    %c0_i32_0 = arith.constant 0 : i32
    return %arg0, %c0_i32 : i32, i32
  }
  func.func @transform_1(%arg0: i32) -> (i32, i32) {
    %c0_i32 = arith.constant 0 : i32
    %c0_i32_0 = arith.constant 0 : i32
    return %arg0, %c0_i32 : i32, i32
  }
  func.func @transform_2(%arg0: i32) -> (i32, i32) {
    %c0_i32 = arith.constant 0 : i32
    %c0_i32_0 = arith.constant 0 : i32
    return %arg0, %c0_i32 : i32, i32
  }
  func.func @transform_3(%arg0: i32) -> (i32, i32, i32) {
    %c0_i32 = arith.constant 0 : i32
    %c0_i32_0 = arith.constant 0 : i32
    %c0_i32_1 = arith.constant 0 : i32
    return %arg0, %c0_i32, %c0_i32_0 : i32, i32, i32
  }
}

</mosaic_0001>

<llo_original>
// kernel: tpu_custom_call.1
$region0: #{tpu_custom_call.1}
  #allocation0 [shape = 'u32[]', space=smem, size = 0x4, offset = 0x4, fixed_abs, tag = 'smem constant byte address 0x4 - core index']
  #allocation1 [shape = 'u32[144,128]{1,0:T(1,128)}', space=vmem, size = 0x12000, scoped, tag = 'internal scratch']
  %s0 = inlined_call_operand.hbm [shape: f32[16,128], index: 0, kind: input, shape index: {}]
  %s1 = inlined_call_operand.hbm [shape: f32[16,128], index: 1, kind: input, shape index: {}]
  %s2 = inlined_call_operand.hbm [shape: f32[16,128], index: 2, kind: input, shape index: {}]
  %s3 = inlined_call_operand.hbm [shape: f32[1,1,128], index: 3, kind: output, shape index: {}]
  %s4 = sld [smem:[#allocation0]]
  $region34: #{tpu_custom_call.1} parent=0
    _
  %s6 = ssub.s32 1, %s4
  %s7 = scalar_select 0, %s6, %s4
  $region1: #{tpu_custom_call.1} parent=0
    #allocation2 [shape = 'u8[8192]{0}', space=vmem, size = 0x2000, scoped, tag = 'input window, operand 0, single buffered']
    #allocation3 [shape = 's32[1]{0}', space=sflag, size = 0x4, scoped, tag = 'scoped memory for tpu_custom_call.1']
    #allocation4 [shape = 's32[1]{0}', space=sflag, size = 0x4, scoped, tag = 'scoped memory for tpu_custom_call.1']
    #allocation5 [shape = 'u8[8192]{0}', space=vmem, size = 0x2000, scoped, tag = 'input window, operand 1, single buffered']
    #allocation6 [shape = 's32[1]{0}', space=sflag, size = 0x4, scoped, tag = 'scoped memory for tpu_custom_call.1']
    #allocation7 [shape = 'u8[8192]{0}', space=vmem, size = 0x2000, scoped, tag = 'input window, operand 2, single buffered']
    #allocation8 [shape = 'u8[512]{0}', space=vmem, size = 0x400, scoped, tag = 'output window, operand 0, single buffered']
    %8 = vsyncpa [#allocation3], 0
    %9 = vsyncpa [#allocation6], 0
    %10 = vsyncpa [#allocation4], 0
    // Predicated region
    $region2: #{tpu_custom_call.1} parent=1 // pred_check
      _
    $region3: #{tpu_custom_call.1} parent=1 // pred_check_branch
      %12 = sbr.rel (0) target = $region5
    $region4: #{tpu_custom_call.1} parent=1 // pred_region
      %s14 = ssub.s32 256, 256
      %15 = vsyncadd [#allocation3], %s14
      %s16 = sshll.u32 [#allocation2], 4
      %s17 = int_to_ptr.vmem [resolvable:$true] %s16
      %22 = dma.hbm_to_vmem [thread:$0]  %s0, 256, %s17, [#allocation3], 128, 128, 8
    $region5: #{tpu_custom_call.1} parent=1 // pred_fallthru
      _
    // Predicated region
    $region6: #{tpu_custom_call.1} parent=1 // pred_check
      _
    $region7: #{tpu_custom_call.1} parent=1 // pred_check_branch
      %24 = sbr.rel (0) target = $region9
    $region8: #{tpu_custom_call.1} parent=1 // pred_region
      %s26 = ssub.s32 256, 256
      %27 = vsyncadd [#allocation6], %s26
      %s28 = sshll.u32 [#allocation5], 4
      %s29 = int_to_ptr.vmem [resolvable:$true] %s28
      %34 = dma.hbm_to_vmem [thread:$0]  %s1, 256, %s29, [#allocation6], 128, 128, 8
    $region9: #{tpu_custom_call.1} parent=1 // pred_fallthru
      _
    // Predicated region
    $region10: #{tpu_custom_call.1} parent=1 // pred_check
      _
    $region11: #{tpu_custom_call.1} parent=1 // pred_check_branch
      %36 = sbr.rel (0) target = $region13
    $region12: #{tpu_custom_call.1} parent=1 // pred_region
      %s38 = ssub.s32 256, 256
      %39 = vsyncadd [#allocation6], %s38
      %s40 = sshll.u32 [#allocation7], 4
      %s41 = int_to_ptr.vmem [resolvable:$true] %s40
      %46 = dma.hbm_to_vmem [thread:$0]  %s2, 256, %s41, [#allocation6], 128, 128, 8
    $region13: #{tpu_custom_call.1} parent=1 // pred_fallthru
      _
    // Predicated region
    $region14: #{tpu_custom_call.1} parent=1 // pred_check
      _
    $region15: #{tpu_custom_call.1} parent=1 // pred_check_branch
      %48 = sbr.rel (0) target = $region17
    $region16: #{tpu_custom_call.1} parent=1 // pred_region
      %49 = dma.done [#allocation3], 256
    $region17: #{tpu_custom_call.1} parent=1 // pred_fallthru
      _
    // Predicated region
    $region18: #{tpu_custom_call.1} parent=1 // pred_check
      _
    $region19: #{tpu_custom_call.1} parent=1 // pred_check_branch
      %51 = sbr.rel (0) target = $region21
    $region20: #{tpu_custom_call.1} parent=1 // pred_region
      %52 = dma.done [#allocation6], 256
    $region21: #{tpu_custom_call.1} parent=1 // pred_fallthru
      _
    // Predicated region
    $region22: #{tpu_custom_call.1} parent=1 // pred_check
      _
    $region23: #{tpu_custom_call.1} parent=1 // pred_check_branch
      %54 = sbr.rel (0) target = $region25
    $region24: #{tpu_custom_call.1} parent=1 // pred_region
      %55 = dma.done [#allocation6], 256
    $region25: #{tpu_custom_call.1} parent=1 // pred_fallthru
      _
    %v56 = vld [vmem:[#allocation2] sm:$0xff]
    %v57 = vld [vmem:[#allocation2 + $0x8] sm:$0xff]
    %v58 = vld [vmem:[#allocation5] sm:$0xff]
    %v59 = vld [vmem:[#allocation5 + $0x8] sm:$0xff]
    %v60 = vsub.f32 %v56, %v58
    %v61 = vsub.f32 %v57, %v59
    %v62 = vmul.f32 %v60, %v60
    %v63 = vmul.f32 %v61, %v61
    %v64 = vld [vmem:[#allocation7] sm:$0xff]
    %v65 = vld [vmem:[#allocation7 + $0x8] sm:$0xff]
    %v66 = vmul.f32 %v64, %v62
    %v67 = vmul.f32 %v65, %v63
    %v68 = vadd.f32 %v66, %v67
    %v69 = vrot.slane %v68, 4
    %v70 = vadd.f32 %v68, %v69
    %v71 = vrot.slane %v70, 2
    %v72 = vadd.f32 %v70, %v71
    %v73 = vrot.slane %v72, 1
    %v74 = vadd.f32 %v72, %v73
    %75 = vst [vmem:[#allocation8] sm:$0x1] %v74
    // Predicated region
    $region26: #{tpu_custom_call.1} parent=1 // pred_check
      _
    $region27: #{tpu_custom_call.1} parent=1 // pred_check_branch
      %77 = sbr.rel (0) target = $region29
    $region28: #{tpu_custom_call.1} parent=1 // pred_region
      %s79 = ssub.s32 16, 16
      %80 = vsyncadd [#allocation4], %s79
      %s82 = sshll.u32 [#allocation8], 4
      %s83 = int_to_ptr.vmem [resolvable:$true] %s82
      %85 = dma.vmem_to_hbm [thread:$0]  %s83, 16, %s3, [#allocation4]
    $region29: #{tpu_custom_call.1} parent=1 // pred_fallthru
      _
    // Predicated region
    $region30: #{tpu_custom_call.1} parent=1 // pred_check
      _
    $region31: #{tpu_custom_call.1} parent=1 // pred_check_branch
      %87 = sbr.rel (0) target = $region33
    $region32: #{tpu_custom_call.1} parent=1 // pred_region
      %88 = dma.done [#allocation4], 16
    $region33: #{tpu_custom_call.1} parent=1 // pred_fallthru
      _
    %89 = vsyncpa [#allocation3], 1
    %90 = vsyncpa [#allocation6], 1
    %91 = vsyncpa [#allocation4], 1

</llo_original>
